<compile_context>
chip_gen: v6e
topology: v6e:2x2x1
jax: 0.10.0
libtpu: 0.0.40
codegen_flags: <defaults>
</compile_context>

<pallas_src>
import jax
import jax.numpy as jnp
from jax import lax
from jax.experimental import pallas as pl
from jax.experimental.pallas import tpu as pltpu


def _round_up(x, n):
    return ((x + n - 1) // n) * n


def _mlp_kernel(x_ref, w1_ref, b1_ref, w2_ref, o_ref):
    # fc1 with batch on the lane axis: (m, d) contracted against (TB, d) over d
    # -> (m, TB) on the MXU (A @ B^T pattern).
    y_t = lax.dot_general(
        w1_ref[...], x_ref[...],
        dimension_numbers=(((1,), (1,)), ((), ())),
        preferred_element_type=jnp.float32,
    )
    y_t = y_t + b1_ref[...]              # (m, 1) lane-broadcast bias   (VPU)
    z_t = jnp.maximum(y_t, 0.0)          # ReLU                         (VPU)
    # fc2 (fixed +-1/m weights, no bias): multiply + sublane reduce -> (1, TB).
    u = jnp.sum(z_t * w2_ref[...], axis=0, keepdims=True)
    # 2*sigmoid(u) - 1 == tanh(u/2): single EUP transcendental.
    o_ref[...] = jnp.tanh(0.5 * u).astype(o_ref.dtype)


def one_hidden_layer_model_relu(x, w1, b1, w2, *, block_b=512):
    """Forward pass.

    x:  (B, d)  float32
    w1: (m, d)  float32   (PyTorch fc1.weight layout)
    b1: (m,)    float32   (zeros if bias_status=False)
    w2: (1, m)  float32   (PyTorch fc2.weight layout, fixed +-1/m)
    Returns (B, 1) float32.
    """
    B, d = x.shape
    m = w1.shape[0]

    # Batch tile: multiple of 128 so the (1, TB) output block is lane-dense.
    TB = min(_round_up(block_b, 128), _round_up(B, 128))
    G = pl.cdiv(B, TB)
    Bp = G * TB
    if Bp != B:
        x = jnp.pad(x, ((0, Bp - B), (0, 0)))  # cheap XLA pad; padded rows sliced off

    b1_col = b1.reshape(m, 1)
    w2_col = w2.reshape(1, m).T  # (m, 1)

    cost = pl.CostEstimate(
        flops=2 * Bp * d * m + 2 * Bp * m,
        transcendentals=Bp,
        bytes_accessed=4 * (Bp * d + m * d + 2 * m + Bp),
    )

    out_row = pl.pallas_call(
        _mlp_kernel,
        out_shape=jax.ShapeDtypeStruct((1, Bp), jnp.float32),
        grid_spec=pltpu.PrefetchScalarGridSpec(
            num_scalar_prefetch=0,
            grid=(G,),
            in_specs=[
                pl.BlockSpec((TB, d), lambda i: (i, 0)),   # x tile (pipelined)
                pl.BlockSpec((m, d), lambda i: (0, 0)),    # w1 (VMEM-resident)
                pl.BlockSpec((m, 1), lambda i: (0, 0)),    # b1 (VMEM-resident)
                pl.BlockSpec((m, 1), lambda i: (0, 0)),    # w2 (VMEM-resident)
            ],
            out_specs=pl.BlockSpec((1, TB), lambda i: (0, i)),  # lane-dense rows
        ),
        compiler_params=pltpu.CompilerParams(
            dimension_semantics=("parallel",),  # shard batch tiles across TCs (v7x)
        ),
        cost_estimate=cost,
    )(x, w1, b1_col, w2_col)

    # Layout plumbing back to the PyTorch interface: (1, Bp) -> (B, 1).
    return out_row[0, :B].reshape(B, 1)


def init_params(key, d, m, bias_status=True):
    """Mirror the PyTorch module: fc1 ~ U(-1/sqrt(d), 1/sqrt(d)) (nn.Linear default),
    fc2.weight fixed to 1/m * [-1,...,-1, +1,...,+1] (non-trainable)."""
    k1, k2 = jax.random.split(key)
    bound1 = 1.0 / jnp.sqrt(d)
    w1 = jax.random.uniform(k1, (m, d), jnp.float32, -bound1, bound1)
    if bias_status:
        b1 = jax.random.uniform(k2, (m,), jnp.float32, -bound1, bound1)
    else:
        b1 = jnp.zeros((m,), jnp.float32)
    half = m // 2
    w2 = (1.0 / m) * jnp.concatenate(
        [-jnp.ones((half,), jnp.float32), jnp.ones((m - half,), jnp.float32)]
    ).reshape(1, m)
    return w1, b1, w2


if __name__ == "__main__":
    key = jax.random.PRNGKey(0)
    kx, kp = jax.random.split(key)

    B, d, m = 192, 32, 64  # small shapes consistent with the module
    x = jax.random.normal(kx, (B, d), jnp.float32)
    w1, b1, w2 = init_params(kp, d, m, bias_status=True)

    # block_b=128 -> 2 grid steps: exercises batch tiling, pipelining and padding.
    out = one_hidden_layer_model_relu(x, w1, b1, w2, block_b=128)
    out = jax.block_until_ready(out)

    # Pure-JAX reference (PyTorch semantics, sigmoid form).
    ref = 2.0 * jax.nn.sigmoid(jnp.maximum(x @ w1.T + b1, 0.0) @ w2.T) - 1.0
    assert out.shape == (B, 1)
    assert jnp.allclose(out, ref, atol=1e-5, rtol=1e-5)

    print("KERNEL_OK")
</pallas_src>

<mosaic_0001>
module attributes {stable_mosaic.version = 11 : i64} {
  func.func @_mlp_kernel(%arg0: i32, %arg1: memref<128x32xf32, #tpu.memory_space<vmem>>, %arg2: memref<64x32xf32, #tpu.memory_space<vmem>>, %arg3: memref<64x1xf32, #tpu.memory_space<vmem>>, %arg4: memref<64x1xf32, #tpu.memory_space<vmem>>, %arg5: memref<1x128xf32, #tpu.memory_space<vmem>>) attributes {dimension_semantics = [#tpu.dimension_semantics<parallel>], iteration_bounds = array<i64: 2>, scalar_prefetch = 0 : i64, scratch_operands = 0 : i64, tpu.core_type = #tpu.core_type<tc>, window_params = [{transform_indices = @transform_0, window_bounds = array<i64: 128, 32>}, {pipeline_mode = #tpu.pipeline_mode<synchronous>, transform_indices = @transform_1, window_bounds = array<i64: 64, 32>}, {pipeline_mode = #tpu.pipeline_mode<synchronous>, transform_indices = @transform_2, window_bounds = array<i64: 64, 1>}, {pipeline_mode = #tpu.pipeline_mode<synchronous>, transform_indices = @transform_3, window_bounds = array<i64: 64, 1>}, {transform_indices = @transform_4, window_bounds = array<i64: 1, 128>}]} {
    %c0 = arith.constant 0 : index
    %c0_0 = arith.constant 0 : index
    %0 = vector.load %arg2[%c0, %c0_0] : memref<64x32xf32, #tpu.memory_space<vmem>>, vector<64x32xf32>
    %c0_1 = arith.constant 0 : index
    %c0_2 = arith.constant 0 : index
    %1 = vector.load %arg1[%c0_1, %c0_2] : memref<128x32xf32, #tpu.memory_space<vmem>>, vector<128x32xf32>
    %cst = arith.constant dense<0.000000e+00> : vector<64x128xf32>
    %2 = tpu.matmul %0, %1, %cst {dimension_numbers = #tpu.dot_dimension_numbers<[1], [1], [0], [0], [0, 0, 1, 0], [], []>} : vector<64x32xf32>, vector<128x32xf32>, vector<64x128xf32> -> vector<64x128xf32>
    %c0_3 = arith.constant 0 : index
    %c0_4 = arith.constant 0 : index
    %3 = vector.load %arg3[%c0_3, %c0_4] : memref<64x1xf32, #tpu.memory_space<vmem>>, vector<64x1xf32>
    %4 = vector.broadcast %3 : vector<64x1xf32> to vector<64x128xf32>
    %5 = arith.addf %2, %4 : vector<64x128xf32>
    %cst_5 = arith.constant 0.000000e+00 : f32
    %6 = vector.broadcast %cst_5 : f32 to vector<64x128xf32>
    %7 = arith.maximumf %5, %6 : vector<64x128xf32>
    %c0_6 = arith.constant 0 : index
    %c0_7 = arith.constant 0 : index
    %8 = vector.load %arg4[%c0_6, %c0_7] : memref<64x1xf32, #tpu.memory_space<vmem>>, vector<64x1xf32>
    %9 = vector.broadcast %8 : vector<64x1xf32> to vector<64x128xf32>
    %10 = arith.mulf %7, %9 : vector<64x128xf32>
    %cst_8 = arith.constant dense<0.000000e+00> : vector<128xf32>
    %11 = vector.multi_reduction <add>, %10, %cst_8 [0] : vector<64x128xf32> to vector<128xf32>
    %12 = vector.shape_cast %11 : vector<128xf32> to vector<1x128xf32>
    %cst_9 = arith.constant 5.000000e-01 : f32
    %13 = vector.broadcast %cst_9 : f32 to vector<1x128xf32>
    %14 = arith.mulf %13, %12 : vector<1x128xf32>
    %15 = math.tanh %14 : vector<1x128xf32>
    %c0_10 = arith.constant 0 : index
    %c0_11 = arith.constant 0 : index
    %16 = vector.load %arg5[%c0_10, %c0_11] : memref<1x128xf32, #tpu.memory_space<vmem>>, vector<1x128xf32>
    tpu.vector_store %arg5[%c0_10, %c0_11], %15 {strides = array<i32>} : memref<1x128xf32, #tpu.memory_space<vmem>>, vector<1x128xf32>,
    return
  }
  func.func @transform_0(%arg0: i32) -> (i32, i32) {
    %c0_i32 = arith.constant 0 : i32
    %c0_i32_0 = arith.constant 0 : i32
    return %arg0, %c0_i32 : i32, i32
  }
  func.func @transform_1(%arg0: i32) -> (i32, i32) {
    %c0_i32 = arith.constant 0 : i32
    %c0_i32_0 = arith.constant 0 : i32
    %c0_i32_1 = arith.constant 0 : i32
    return %c0_i32, %c0_i32_0 : i32, i32
  }
  func.func @transform_2(%arg0: i32) -> (i32, i32) {
    %c0_i32 = arith.constant 0 : i32
    %c0_i32_0 = arith.constant 0 : i32
    %c0_i32_1 = arith.constant 0 : i32
    return %c0_i32, %c0_i32_0 : i32, i32
  }
  func.func @transform_3(%arg0: i32) -> (i32, i32) {
    %c0_i32 = arith.constant 0 : i32
    %c0_i32_0 = arith.constant 0 : i32
    %c0_i32_1 = arith.constant 0 : i32
    return %c0_i32, %c0_i32_0 : i32, i32
  }
  func.func @transform_4(%arg0: i32) -> (i32, i32) {
    %c0_i32 = arith.constant 0 : i32
    %c0_i32_0 = arith.constant 0 : i32
    return %c0_i32, %arg0 : i32, i32
  }
}

</mosaic_0001>

<llo_original>
// kernel: tpu_custom_call.1
$region0: #{tpu_custom_call.1}
  #allocation0 [shape = 'u32[]', space=smem, size = 0x4, offset = 0x4, fixed_abs, tag = 'smem constant byte address 0x4 - core index']
  #allocation1 [shape = 'u32[144,128]{1,0:T(1,128)}', space=vmem, size = 0x12000, scoped, tag = 'internal scratch']
  %s0 = inlined_call_operand.vmem [shape: f32[256,32], index: 0, kind: input, shape index: {}]
  %s1 = inlined_call_operand.vmem [shape: f32[64,32], index: 1, kind: input, shape index: {}]
  %s2 = inlined_call_operand.vmem [shape: f32[64,1], index: 2, kind: input, shape index: {}]
  %s3 = inlined_call_operand.vmem [shape: f32[64,1], index: 3, kind: input, shape index: {}]
  %s4 = inlined_call_operand.hbm [shape: f32[1,256], index: 4, kind: output, shape index: {}]
  %s5 = sld [smem:[#allocation0]]
  $region49: #{tpu_custom_call.1} parent=0
    _
  %s7 = ssub.s32 1, %s5
  %s8 = scalar_select 0, %s7, %s5
  $region1: #{tpu_custom_call.1} parent=0
    #allocation2 [shape = 'u8[1024]{0}', space=vmem, size = 0x400, scoped, tag = 'output window, operand 0']
    #allocation3 [shape = 's32[2]{0}', space=sflag, size = 0x8, scoped, tag = 'scoped memory for tpu_custom_call.1']
    %9 = vsyncpa [#allocation3], 0
    %s10 = scalar_lea.sflag [#allocation3], 1
    %11 = vsyncpa %s10, 0
    loop: start=0, step=1, limit=4
    $region2: #{tpu_custom_call.1} parent=1 // loop_pre_header
      _
    $region3: #{tpu_custom_call.1} parent=1 // loop_header
      %s13 = sphi 0, %s17
      %p14 = scmp.ge.s32.totalorder %s13, 4
      %s23 = sphi 0, %s25
      %s26 = sphi 0, %s23
      %s27 = sphi 0, %s26
      %s43 = sphi 0, %s27
      %s47 = sphi 0, %s47
      %s49 = sphi 0, %s47
      %s50 = sphi 0, %s49
      %s64 = sphi 0, %s50
      %s68 = sphi 0, %s68
      %s70 = sphi 0, %s68
      %s71 = sphi 0, %s70
      %s85 = sphi 0, %s71
      %s89 = sphi 0, %s89
      %s91 = sphi 0, %s89
      %s92 = sphi 0, %s91
      %s106 = sphi 0, %s92
      %s112 = sphi 0, %s114
      %s115 = sphi 0, %s112
      %s116 = sphi 0, %s115
      %s132 = sphi 0, %s116
    $region4: #{tpu_custom_call.1} parent=1 // loop_header_branch
      %16 = sbr.rel (%p14) target = $region8
    $region5: #{tpu_custom_call.1} parent=1 // loop_body
      %s18 = ssub.s32 %s13, 1
      %s19 = ssub.s32 %s13, 2
      %s20 = sadd.s32 %s13, 1
      %s21 = ssub.s32 %s13, %s20
      %p22 = scmp.eq.s32.totalorder %s21, 0
      %s24 = sadd.s32 %s23, 1
      %s25 = scalar_select %p22, %s23, %s24
      %p28 = pneg %p22
      %p29 = scmp.eq.s32.totalorder %s13, 1
      %p30 = por %p28, %p29
      %p31 = scmp.ne.s32.totalorder %s23, %s26
      %p32 = scmp.eq.s32.totalorder %s13, 0
      %p33 = por %p31, %p32
      %p34 = scmp.ne.s32.totalorder %s23, %s26
      %p35 = scmp.eq.s32.totalorder %s18, 1
      %p36 = por %p34, %p35
      %p37 = scmp.ne.s32.totalorder %s26, %s27
      %p38 = scmp.eq.s32.totalorder %s18, 0
      %p39 = por %p37, %p38
      %p40 = scmp.ne.s32.totalorder %s26, %s27
      %p41 = scmp.eq.s32.totalorder %s19, 1
      %p42 = por %p40, %p41
      %p44 = scmp.ne.s32.totalorder %s27, %s43
      %p45 = scmp.eq.s32.totalorder %s19, 0
      %p46 = por %p44, %p45
      %s48 = sadd.s32 %s47, 1
      %p51 = scmp.eq.s32.totalorder %s13, 1
      %p52 = scmp.ne.s32.totalorder %s47, %s49
      %p53 = scmp.eq.s32.totalorder %s13, 0
      %p54 = por %p52, %p53
      %p55 = scmp.ne.s32.totalorder %s47, %s49
      %p56 = scmp.eq.s32.totalorder %s18, 1
      %p57 = por %p55, %p56
      %p58 = scmp.ne.s32.totalorder %s49, %s50
      %p59 = scmp.eq.s32.totalorder %s18, 0
      %p60 = por %p58, %p59
      %p61 = scmp.ne.s32.totalorder %s49, %s50
      %p62 = scmp.eq.s32.totalorder %s19, 1
      %p63 = por %p61, %p62
      %p65 = scmp.ne.s32.totalorder %s50, %s64
      %p66 = scmp.eq.s32.totalorder %s19, 0
      %p67 = por %p65, %p66
      %s69 = sadd.s32 %s68, 1
      %p72 = scmp.eq.s32.totalorder %s13, 1
      %p73 = scmp.ne.s32.totalorder %s68, %s70
      %p74 = scmp.eq.s32.totalorder %s13, 0
      %p75 = por %p73, %p74
      %p76 = scmp.ne.s32.totalorder %s68, %s70
      %p77 = scmp.eq.s32.totalorder %s18, 1
      %p78 = por %p76, %p77
      %p79 = scmp.ne.s32.totalorder %s70, %s71
      %p80 = scmp.eq.s32.totalorder %s18, 0
      %p81 = por %p79, %p80
      %p82 = scmp.ne.s32.totalorder %s70, %s71
      %p83 = scmp.eq.s32.totalorder %s19, 1
      %p84 = por %p82, %p83
      %p86 = scmp.ne.s32.totalorder %s71, %s85
      %p87 = scmp.eq.s32.totalorder %s19, 0
      %p88 = por %p86, %p87
      %s90 = sadd.s32 %s89, 1
      %p93 = scmp.eq.s32.totalorder %s13, 1
      %p94 = scmp.ne.s32.totalorder %s89, %s91
      %p95 = scmp.eq.s32.totalorder %s13, 0
      %p96 = por %p94, %p95
      %p97 = scmp.ne.s32.totalorder %s89, %s91
      %p98 = scmp.eq.s32.totalorder %s18, 1
      %p99 = por %p97, %p98
      %p100 = scmp.ne.s32.totalorder %s91, %s92
      %p101 = scmp.eq.s32.totalorder %s18, 0
      %p102 = por %p100, %p101
      %p103 = scmp.ne.s32.totalorder %s91, %s92
      %p104 = scmp.eq.s32.totalorder %s19, 1
      %p105 = por %p103, %p104
      %p107 = scmp.ne.s32.totalorder %s92, %s106
      %p108 = scmp.eq.s32.totalorder %s19, 0
      %p109 = por %p107, %p108
      %s110 = ssub.s32 %s13, %s20
      %p111 = scmp.eq.s32.totalorder %s110, 0
      %s113 = sadd.s32 %s112, 1
      %s114 = scalar_select %p111, %s112, %s113
      %p117 = pneg %p111
      %p118 = scmp.eq.s32.totalorder %s13, 1
      %p119 = por %p117, %p118
      %p120 = scmp.ne.s32.totalorder %s112, %s115
      %p121 = scmp.eq.s32.totalorder %s13, 0
      %p122 = por %p120, %p121
      %p123 = scmp.ne.s32.totalorder %s112, %s115
      %p124 = scmp.eq.s32.totalorder %s18, 1
      %p125 = por %p123, %p124
      %p126 = scmp.ne.s32.totalorder %s115, %s116
      %p127 = scmp.eq.s32.totalorder %s18, 0
      %p128 = por %p126, %p127
      %p129 = scmp.ne.s32.totalorder %s115, %s116
      %p130 = scmp.eq.s32.totalorder %s19, 1
      %p131 = por %p129, %p130
      %p133 = scmp.ne.s32.totalorder %s116, %s132
      %p134 = scmp.eq.s32.totalorder %s19, 0
      %p135 = por %p133, %p134
      %p136 = scmp.le.s32.totalorder 1, %s13
      %p137 = scmp.lt.s32.totalorder %s13, 3
      %p138 = pnand %p136, %p137
      %p139 = pneg %p138
      // Predicated region
      $region9: #{tpu_custom_call.1} parent=5 // pred_check
        _
      $region10: #{tpu_custom_call.1} parent=5 // pred_check_branch
        %141 = sbr.rel (%p138) target = $region12
      $region11: #{tpu_custom_call.1} parent=5 // pred_region
        %s142 = ssub.s32 %s13, 1
        // Predicated region
        $region13: #{tpu_custom_call.1} parent=11 // pred_check
          %p143 = pneg %p60
        $region14: #{tpu_custom_call.1} parent=11 // pred_check_branch
          %145 = sbr.rel (%p143) target = $region16
        $region15: #{tpu_custom_call.1} parent=11 // pred_region
          _
        $region16: #{tpu_custom_call.1} parent=11 // pred_fallthru
          _
        // Predicated region
        $region17: #{tpu_custom_call.1} parent=11 // pred_check
          %p146 = pneg %p81
        $region18: #{tpu_custom_call.1} parent=11 // pred_check_branch
          %148 = sbr.rel (%p146) target = $region20
        $region19: #{tpu_custom_call.1} parent=11 // pred_region
          _
        $region20: #{tpu_custom_call.1} parent=11 // pred_fallthru
          _
        // Predicated region
        $region21: #{tpu_custom_call.1} parent=11 // pred_check
          %p149 = pneg %p102
        $region22: #{tpu_custom_call.1} parent=11 // pred_check_branch
          %151 = sbr.rel (%p149) target = $region24
        $region23: #{tpu_custom_call.1} parent=11 // pred_region
          _
        $region24: #{tpu_custom_call.1} parent=11 // pred_fallthru
          _
      $region12: #{tpu_custom_call.1} parent=5 // pred_fallthru
        _
      %p152 = scmp.lt.s32.totalorder %s13, 2
      // Predicated region
      $region25: #{tpu_custom_call.1} parent=5 // pred_check
        %p153 = pneg %p152
      $region26: #{tpu_custom_call.1} parent=5 // pred_check_branch
        %155 = sbr.rel (%p153) target = $region28
      $region27: #{tpu_custom_call.1} parent=5 // pred_region
        // Predicated region
        $region29: #{tpu_custom_call.1} parent=27 // pred_check
          %p156 = pneg %p33
        $region30: #{tpu_custom_call.1} parent=27 // pred_check_branch
          %158 = sbr.rel (%p156) target = $region32
        $region31: #{tpu_custom_call.1} parent=27 // pred_region
          %s159 = smul.u32 16, %s13
          %p160 = scmp.lt.s32.totalorder %s159, 31
          %s161 = scalar_select %p160, %s159, 31
          %s162 = smul.addr %s161, 8
          %s163 = scalar_lea.vmem %s0, %s162
          %s164 = smul.u32 16, %s13
        $region32: #{tpu_custom_call.1} parent=27 // pred_fallthru
          _
      $region28: #{tpu_custom_call.1} parent=5 // pred_fallthru
        _
      %p165 = scmp.le.s32.totalorder 1, %s13
      %p166 = scmp.lt.s32.totalorder %s13, 3
      %p167 = pnand %p165, %p166
      %p168 = pneg %p167
      // Predicated region
      $region33: #{tpu_custom_call.1} parent=5 // pred_check
        _
      $region34: #{tpu_custom_call.1} parent=5 // pred_check_branch
        %170 = sbr.rel (%p167) target = $region36
      $region35: #{tpu_custom_call.1} parent=5 // pred_region
        %s171 = ssub.s32 %s13, 1
        %s172 = smul.u32 16, %s18
        %p173 = scmp.lt.s32.totalorder %s172, 31
        %s174 = scalar_select %p173, %s172, 31
        %s175 = smul.addr %s174, 8
        %s176 = scalar_lea.vmem %s0, %s175
        %p177 = pneg %p39
        %p178 = pneg %p36
        %p179 = pneg %p60
        %p180 = pneg %p57
        %p181 = pneg %p81
        %p182 = pneg %p78
        %p183 = pneg %p102
        %p184 = pneg %p99
        %p185 = pneg %p128
        %p186 = pneg %p125
        %s187 = sand.u32 %s115, 1
        %s188 = scalar_lea.sflag [#allocation3], %s187
        %s189 = sand.u32 %s115, 1
        %s190 = scalar_lea.vmem [#allocation2], %s189
        %s191 = smul.u32 16, %s18
        %p192 = scmp.lt.s32.totalorder %s191, 31
        %s193 = scalar_select %p192, %s191, 31
        %s194 = smul.addr %s193, 8
        %s195 = scalar_lea.vmem %s0, %s194
        %s196 = smul.u32 16, %s18
        %v197 = vld [vmem:[%s1] sm:$0xff]
        %v198 = vld [vmem:[%s1 + $0x8] sm:$0xff]
        %v199 = vld [vmem:[%s1 + $0x10] sm:$0xff]
        %v200 = vld [vmem:[%s1 + $0x18] sm:$0xff]
        %v201 = vld [vmem:[%s1 + $0x20] sm:$0xff]
        %v202 = vld [vmem:[%s1 + $0x28] sm:$0xff]
        %v203 = vld [vmem:[%s1 + $0x30] sm:$0xff]
        %v204 = vld [vmem:[%s1 + $0x38] sm:$0xff]
        %v205 = vld [vmem:[%s195] sm:$0xff]
        %v206 = vld [vmem:[%s195 + $0x8] sm:$0xff]
        %v207 = vld [vmem:[%s195 + $0x10] sm:$0xff]
        %v208 = vld [vmem:[%s195 + $0x18] sm:$0xff]
        %v209 = vld [vmem:[%s195 + $0x20] sm:$0xff]
        %v210 = vld [vmem:[%s195 + $0x28] sm:$0xff]
        %v211 = vld [vmem:[%s195 + $0x30] sm:$0xff]
        %v212 = vld [vmem:[%s195 + $0x38] sm:$0xff]
        %v213 = vld [vmem:[%s195 + $0x40] sm:$0xff]
        %v214 = vld [vmem:[%s195 + $0x48] sm:$0xff]
        %v215 = vld [vmem:[%s195 + $0x50] sm:$0xff]
        %v216 = vld [vmem:[%s195 + $0x58] sm:$0xff]
        %v217 = vld [vmem:[%s195 + $0x60] sm:$0xff]
        %v218 = vld [vmem:[%s195 + $0x68] sm:$0xff]
        %v219 = vld [vmem:[%s195 + $0x70] sm:$0xff]
        %v220 = vld [vmem:[%s195 + $0x78] sm:$0xff]
        %v221 = vld [vmem:[%s2] sm:$0xff]
        %v222 = vld [vmem:[%s2 + $0x8] sm:$0xff]
        %v223 = vld [vmem:[%s2 + $0x10] sm:$0xff]
        %v224 = vld [vmem:[%s2 + $0x18] sm:$0xff]
        %v225 = vld [vmem:[%s2 + $0x20] sm:$0xff]
        %v226 = vld [vmem:[%s2 + $0x28] sm:$0xff]
        %v227 = vld [vmem:[%s2 + $0x30] sm:$0xff]
        %v228 = vld [vmem:[%s2 + $0x38] sm:$0xff]
        %230 = vset.pattern.permute.xlu0 0
        %231 = vperm.xlu0 %230, %v221
        %v232 = vpop.permute.xlu0 %231
        %235 = vset.pattern.permute.xlu0 0
        %236 = vperm.xlu0 %235, %v222
        %v237 = vpop.permute.xlu0 %236
        %240 = vset.pattern.permute.xlu0 0
        %241 = vperm.xlu0 %240, %v223
        %v242 = vpop.permute.xlu0 %241
        %245 = vset.pattern.permute.xlu0 0
        %246 = vperm.xlu0 %245, %v224
        %v247 = vpop.permute.xlu0 %246
        %250 = vset.pattern.permute.xlu0 0
        %251 = vperm.xlu0 %250, %v225
        %v252 = vpop.permute.xlu0 %251
        %255 = vset.pattern.permute.xlu0 0
        %256 = vperm.xlu0 %255, %v226
        %v257 = vpop.permute.xlu0 %256
        %260 = vset.pattern.permute.xlu0 0
        %261 = vperm.xlu0 %260, %v227
        %v262 = vpop.permute.xlu0 %261
        %265 = vset.pattern.permute.xlu0 0
        %266 = vperm.xlu0 %265, %v228
        %v267 = vpop.permute.xlu0 %266
        %vm269 = vcmask 261120
        %v271 = vsel %vm269, %v197, 0
        %v274 = vsel %vm269, %v198, 0
        %v277 = vsel %vm269, %v199, 0
        %v280 = vsel %vm269, %v200, 0
        %v283 = vsel %vm269, %v201, 0
        %v286 = vsel %vm269, %v202, 0
        %v289 = vsel %vm269, %v203, 0
        %v292 = vsel %vm269, %v204, 0
        %v295 = vsel %vm269, %v205, 0
        %v298 = vsel %vm269, %v206, 0
        %v301 = vsel %vm269, %v207, 0
        %v304 = vsel %vm269, %v208, 0
        %v307 = vsel %vm269, %v209, 0
        %v310 = vsel %vm269, %v210, 0
        %v313 = vsel %vm269, %v211, 0
        %v316 = vsel %vm269, %v212, 0
        %v319 = vsel %vm269, %v213, 0
        %v322 = vsel %vm269, %v214, 0
        %v325 = vsel %vm269, %v215, 0
        %v328 = vsel %vm269, %v216, 0
        %v331 = vsel %vm269, %v217, 0
        %v334 = vsel %vm269, %v218, 0
        %v337 = vsel %vm269, %v219, 0
        %v340 = vsel %vm269, %v220, 0
        %342 = vmatprep.subr.mxu0 0.0
        %343 = vmatpush1.xpose.msra.mxu0 %v340
        %344 = vmatprep.subr.mxu0 0.0
        %345 = vmatpush1.xpose.msra.mxu0 %v337
        %346 = vmatprep.subr.mxu0 0.0
        %347 = vmatpush1.xpose.msra.mxu0 %v334
        %348 = vmatprep.subr.mxu0 0.0
        %349 = vmatpush1.xpose.msra.mxu0 %v331
        %350 = vmatprep.subr.mxu0 0.0
        %351 = vmatpush1.xpose.msra.mxu0 %v328
        %352 = vmatprep.subr.mxu0 0.0
        %353 = vmatpush1.xpose.msra.mxu0 %v325
        %354 = vmatprep.subr.mxu0 0.0
        %355 = vmatpush1.xpose.msra.mxu0 %v322
        %356 = vmatprep.subr.mxu0 0.0
        %357 = vmatpush1.xpose.msra.mxu0 %v319
        %358 = vmatprep.subr.mxu0 0.0
        %359 = vmatpush1.xpose.msra.mxu0 %v316
        %360 = vmatprep.subr.mxu0 0.0
        %361 = vmatpush1.xpose.msra.mxu0 %v313
        %362 = vmatprep.subr.mxu0 0.0
        %363 = vmatpush1.xpose.msra.mxu0 %v310
        %364 = vmatprep.subr.mxu0 0.0
        %365 = vmatpush1.xpose.msra.mxu0 %v307
        %366 = vmatprep.subr.mxu0 0.0
        %367 = vmatpush1.xpose.msra.mxu0 %v304
        %368 = vmatprep.subr.mxu0 0.0
        %369 = vmatpush1.xpose.msra.mxu0 %v301
        %370 = vmatprep.subr.mxu0 0.0
        %371 = vmatpush1.xpose.msra.mxu0 %v298
        %372 = vmatprep.subr.mxu0 0.0
        %373 = vmatpush1.xpose.msra.mxu0 %v295
        %374 = vmatprep.subr.mxu0 0.0
        %375 = vmatpush2.xpose.msra.mxu0 0.0
        %376 = vmatprep.subr.mxu0 0.0
        %377 = vmatpush2.xpose.msra.mxu0 0.0
        %378 = vmatprep.subr.mxu0 0.0
        %379 = vmatpush2.xpose.msra.mxu0 0.0
        %380 = vmatprep.subr.mxu0 0.0
        %381 = vmatpush2.xpose.msra.mxu0 0.0
        %382 = vmatprep.subr.mxu0 0.0
        %383 = vmatpush2.xpose.msra.mxu0 0.0
        %384 = vmatprep.subr.mxu0 0.0
        %385 = vmatpush2.xpose.msra.mxu0 0.0
        %386 = vmatprep.subr.mxu0 0.0
        %387 = vmatpush2.xpose.msra.mxu0 0.0
        %388 = vmatprep.subr.mxu0 0.0
        %389 = vmatpush2.xpose.msra.mxu0 0.0
        %390 = vmatprep.subr.mxu0 0.0
        %391 = vmatpush2.xpose.msra.mxu0 0.0
        %392 = vmatprep.subr.mxu0 0.0
        %393 = vmatpush2.xpose.msra.mxu0 0.0
        %394 = vmatprep.subr.mxu0 0.0
        %395 = vmatpush2.xpose.msra.mxu0 0.0
        %396 = vmatprep.subr.mxu0 0.0
        %397 = vmatpush2.xpose.msra.mxu0 0.0
        %398 = vmatprep.subr.mxu0 0.0
        %399 = vmatpush2.xpose.msra.mxu0 0.0
        %400 = vmatprep.subr.mxu0 0.0
        %401 = vmatpush2.xpose.msra.mxu0 0.0
        %402 = vmatprep.subr.mxu0 0.0
        %403 = vmatpush2.xpose.msra.mxu0 0.0
        %404 = vmatprep.subr.mxu0 0.0
        %405 = vmatpush2.xpose.msra.mxu0 0.0
        %406 = vmatprep.mubr.f32.mxu0 0.0
        %407 = vmatmul.mubr.f32.gmra.mxu0 %v271
        %v408 = vpop.f32.mrf.mxu0
        %v409 = vadd.f32 %v232, %v408
        %v410 = vpop.f32.mrf.mxu0
        %411 = vmatprep.mubr.f32.mxu0 0.0
        %412 = vmatmul.mubr.f32.gmra.mxu0 %v274
        %v413 = vpop.f32.mrf.mxu0
        %v414 = vadd.f32 %v237, %v413
        %v415 = vpop.f32.mrf.mxu0
        %416 = vmatprep.mubr.f32.mxu0 0.0
        %417 = vmatmul.mubr.f32.gmra.mxu0 %v277
        %v418 = vpop.f32.mrf.mxu0
        %v419 = vadd.f32 %v242, %v418
        %v420 = vpop.f32.mrf.mxu0
        %421 = vmatprep.mubr.f32.mxu0 0.0
        %422 = vmatmul.mubr.f32.gmra.mxu0 %v280
        %v423 = vpop.f32.mrf.mxu0
        %v424 = vadd.f32 %v247, %v423
        %v425 = vpop.f32.mrf.mxu0
        %426 = vmatprep.mubr.f32.mxu0 0.0
        %427 = vmatmul.mubr.f32.gmra.mxu0 %v283
        %v428 = vpop.f32.mrf.mxu0
        %v429 = vadd.f32 %v252, %v428
        %v430 = vpop.f32.mrf.mxu0
        %431 = vmatprep.mubr.f32.mxu0 0.0
        %432 = vmatmul.mubr.f32.gmra.mxu0 %v286
        %v433 = vpop.f32.mrf.mxu0
        %v434 = vadd.f32 %v257, %v433
        %v435 = vpop.f32.mrf.mxu0
        %436 = vmatprep.mubr.f32.mxu0 0.0
        %437 = vmatmul.mubr.f32.gmra.mxu0 %v289
        %v438 = vpop.f32.mrf.mxu0
        %v439 = vadd.f32 %v262, %v438
        %v440 = vpop.f32.mrf.mxu0
        %441 = vmatprep.mubr.f32.mxu0 0.0
        %442 = vmatmul.mubr.f32.gmra.mxu0 %v292
        %v443 = vpop.f32.mrf.mxu0
        %v444 = vadd.f32 %v267, %v443
        %v445 = vpop.f32.mrf.mxu0
        %446 = vdwg.mxu0
        %v447 = vmax.f32 %v409, 0.0
        %v448 = vmax.f32 %v414, 0.0
        %v449 = vmax.f32 %v419, 0.0
        %v450 = vmax.f32 %v424, 0.0
        %v451 = vmax.f32 %v429, 0.0
        %v452 = vmax.f32 %v434, 0.0
        %v453 = vmax.f32 %v439, 0.0
        %v454 = vmax.f32 %v444, 0.0
        %v455 = vld [vmem:[%s3] sm:$0xff]
        %v456 = vld [vmem:[%s3 + $0x8] sm:$0xff]
        %v457 = vld [vmem:[%s3 + $0x10] sm:$0xff]
        %v458 = vld [vmem:[%s3 + $0x18] sm:$0xff]
        %v459 = vld [vmem:[%s3 + $0x20] sm:$0xff]
        %v460 = vld [vmem:[%s3 + $0x28] sm:$0xff]
        %v461 = vld [vmem:[%s3 + $0x30] sm:$0xff]
        %v462 = vld [vmem:[%s3 + $0x38] sm:$0xff]
        %464 = vset.pattern.permute.xlu0 0
        %465 = vperm.xlu0 %464, %v455
        %v466 = vpop.permute.xlu0 %465
        %469 = vset.pattern.permute.xlu0 0
        %470 = vperm.xlu0 %469, %v456
        %v471 = vpop.permute.xlu0 %470
        %474 = vset.pattern.permute.xlu0 0
        %475 = vperm.xlu0 %474, %v457
        %v476 = vpop.permute.xlu0 %475
        %479 = vset.pattern.permute.xlu0 0
        %480 = vperm.xlu0 %479, %v458
        %v481 = vpop.permute.xlu0 %480
        %484 = vset.pattern.permute.xlu0 0
        %485 = vperm.xlu0 %484, %v459
        %v486 = vpop.permute.xlu0 %485
        %489 = vset.pattern.permute.xlu0 0
        %490 = vperm.xlu0 %489, %v460
        %v491 = vpop.permute.xlu0 %490
        %494 = vset.pattern.permute.xlu0 0
        %495 = vperm.xlu0 %494, %v461
        %v496 = vpop.permute.xlu0 %495
        %499 = vset.pattern.permute.xlu0 0
        %500 = vperm.xlu0 %499, %v462
        %v501 = vpop.permute.xlu0 %500
        %v503 = vmul.f32 %v447, %v466
        %v504 = vmul.f32 %v448, %v471
        %v505 = vmul.f32 %v449, %v476
        %v506 = vmul.f32 %v450, %v481
        %v507 = vmul.f32 %v451, %v486
        %v508 = vmul.f32 %v452, %v491
        %v509 = vmul.f32 %v453, %v496
        %v510 = vmul.f32 %v454, %v501
        %v511 = vadd.f32 %v503, %v504
        %v512 = vadd.f32 %v511, %v505
        %v513 = vadd.f32 %v512, %v506
        %v514 = vadd.f32 %v513, %v507
        %v515 = vadd.f32 %v514, %v508
        %v516 = vadd.f32 %v515, %v509
        %v517 = vadd.f32 %v516, %v510
        %v518 = vrot.slane %v517, 4
        %v519 = vadd.f32 %v517, %v518
        %v520 = vrot.slane %v519, 2
        %v521 = vadd.f32 %v519, %v520
        %v522 = vrot.slane %v521, 1
        %v523 = vadd.f32 %v521, %v522
        %v524 = vmul.f32 %v523, 0.5
        %v525 = vtanh.pop %v524
        %526 = vst [vmem:[%s190] sm:$0x1] %v525
        %s527 = sand.u32 %s115, 1
        %s528 = scalar_lea.sflag [#allocation3], %s527
        %s529 = sand.u32 %s115, 1
        %s530 = scalar_lea.vmem [#allocation2], %s529
        // Predicated region
        $region37: #{tpu_custom_call.1} parent=35 // pred_check
          %p531 = pneg %p125
        $region38: #{tpu_custom_call.1} parent=35 // pred_check_branch
          %533 = sbr.rel (%p531) target = $region40
        $region39: #{tpu_custom_call.1} parent=35 // pred_region
          %s535 = ssub.s32 16, 16
          %536 = vsyncadd %s528, %s535
          %s537 = smul.addr %s18, 16
          %s538 = scalar_lea.hbm %s4, %s537
          %s540 = sshll.u32 %s530, 4
          %s541 = int_to_ptr.vmem [resolvable:$true] %s540
          %543 = dma.vmem_to_hbm [thread:$0]  %s541, 16, %s538, %s528
        $region40: #{tpu_custom_call.1} parent=35 // pred_fallthru
          _
      $region36: #{tpu_custom_call.1} parent=5 // pred_fallthru
        _
      %p544 = scmp.le.s32.totalorder 2, %s13
      // Predicated region
      $region41: #{tpu_custom_call.1} parent=5 // pred_check
        %p545 = pneg %p544
      $region42: #{tpu_custom_call.1} parent=5 // pred_check_branch
        %547 = sbr.rel (%p545) target = $region44
      $region43: #{tpu_custom_call.1} parent=5 // pred_region
        %s548 = ssub.s32 %s13, 2
        // Predicated region
        $region45: #{tpu_custom_call.1} parent=43 // pred_check
          %p549 = pneg %p131
        $region46: #{tpu_custom_call.1} parent=43 // pred_check_branch
          %551 = sbr.rel (%p549) target = $region48
        $region47: #{tpu_custom_call.1} parent=43 // pred_region
          %s552 = sand.u32 %s116, 1
          %s553 = scalar_lea.sflag [#allocation3], %s552
          %s554 = sand.u32 %s116, 1
          %s555 = scalar_lea.vmem [#allocation2], %s554
          %556 = dma.done %s553, 16
        $region48: #{tpu_custom_call.1} parent=43 // pred_fallthru
          _
      $region44: #{tpu_custom_call.1} parent=5 // pred_fallthru
        _
    $region6: #{tpu_custom_call.1} parent=1 // loop_footer
      %s17 = sadd.s32 1, %s13
    $region7: #{tpu_custom_call.1} parent=1 // loop_footer_branch
      %12 = sbr.rel target = $region3
    $region8: #{tpu_custom_call.1} parent=1 // loop_exit
      _
    %557 = vsyncpa [#allocation3], 1
    %s558 = scalar_lea.sflag [#allocation3], 1
    %559 = vsyncpa %s558, 1

</llo_original>
